<compile_context>
chip_gen: v7x
topology: tpu7x:2x2x1
jax: 0.10.0
libtpu: 0.0.40
codegen_flags: <defaults>
</compile_context>

<pallas_src>
import functools

import jax
import jax.numpy as jnp
from jax.experimental import pallas as pl
from jax.experimental.pallas import tpu as pltpu


# ----------------------------------------------------------------------------
# Kernel
# ----------------------------------------------------------------------------
def spherical_pad_kernel(x_ref, o_ref, *, pad):
    # x_ref: (1, Cblk, H, W)               one batch, Cblk channels
    # o_ref: (1, Cblk, H + 2p, W + 2p)
    x = x_ref[0]                                         # (Cblk, H, W)
    Cblk, H, W = x.shape
    Wout = W + 2 * pad

    # 1) circular pad along the width (lane) axis:
    #    [last p columns, original, first p columns]
    xw = jnp.concatenate([x[:, :, W - pad:], x, x[:, :, :pad]], axis=-1)

    # 2) replicate (edge) pad along the height (sublane) axis.
    top = jnp.broadcast_to(xw[:, :1, :], (Cblk, pad, Wout))
    bot = jnp.broadcast_to(xw[:, H - 1:, :], (Cblk, pad, Wout))

    # single full-block store (no per-row partial stores along the sublane axis)
    o_ref[0] = jnp.concatenate([top, xw, bot], axis=1)   # (Cblk, Hout, Wout)


# ----------------------------------------------------------------------------
# Wrapper
# ----------------------------------------------------------------------------
def spherical_pad(x, padding):
    """Pallas implementation of SphericalPad(padding).forward(x), x in NCHW."""
    if padding == 0:
        return x
    B, C, H, W = x.shape
    if padding < 0 or padding > W or padding >= H:
        raise ValueError(
            "padding must satisfy 0 <= padding <= W and padding < H "
            f"(got padding={padding}, H={H}, W={W})")

    Hout, Wout = H + 2 * padding, W + 2 * padding
    itemsize = jnp.dtype(x.dtype).itemsize

    # --- choose channel block size -------------------------------------------
    in_plane_bytes = H * W * itemsize
    out_plane_bytes = Hout * Wout * itemsize
    plane_bytes = in_plane_bytes + out_plane_bytes

    OUT_BLOCK_TARGET = 4 * 1024 * 1024     # ~1-4 MiB output blocks (feedback)
    DOUBLE_BUF_BUDGET = 16 * 1024 * 1024   # double-buffered footprint cap (v7x-safe)

    cblk = 1
    for d in range(1, C + 1):
        if C % d != 0:
            continue
        if (d * out_plane_bytes <= OUT_BLOCK_TARGET
                and 2 * d * plane_bytes <= DOUBLE_BUF_BUDGET):
            cblk = d

    grid = (B, C // cblk)

    # --- scoped-VMEM limit sized from the real double-buffered footprint ------
    needed_vmem = 2 * cblk * plane_bytes + (4 << 20)     # + headroom
    vmem_limit = int(min(max(needed_vmem, 32 << 20), 128 << 20))

    bytes_accessed = B * C * plane_bytes

    kern = functools.partial(spherical_pad_kernel, pad=padding)
    return pl.pallas_call(
        kern,
        out_shape=jax.ShapeDtypeStruct((B, C, Hout, Wout), x.dtype),
        grid=grid,
        in_specs=[pl.BlockSpec((1, cblk, H, W), lambda b, c: (b, c, 0, 0))],
        out_specs=pl.BlockSpec((1, cblk, Hout, Wout), lambda b, c: (b, c, 0, 0)),
        compiler_params=pltpu.CompilerParams(
            dimension_semantics=("parallel", "parallel"),
            vmem_limit_bytes=vmem_limit),
        cost_estimate=pl.CostEstimate(
            flops=0, transcendentals=0, bytes_accessed=int(bytes_accessed)),
    )(x)


# ----------------------------------------------------------------------------
# Pure-JAX reference (for in-script validation)
# ----------------------------------------------------------------------------
def spherical_pad_ref(x, p):
    # circular along W (identical to __pad_circular_nd with dim=[3])
    xw = jnp.concatenate([x[..., -p:], x, x[..., :p]], axis=-1)
    # replicate along H (identical to F.pad(pad=[0,0,p,p], mode='replicate'))
    return jnp.pad(xw, ((0, 0), (0, 0), (p, p), (0, 0)), mode="edge")


def _check(x, padding):
    out = jax.block_until_ready(spherical_pad(x, padding))
    B, C, H, W = x.shape
    assert out.shape == (B, C, H + 2 * padding, W + 2 * padding), out.shape
    ref = spherical_pad_ref(x, padding)
    # pure data movement -> exact equality expected in every dtype
    assert bool(jnp.array_equal(out, ref)), (
        float(jnp.max(jnp.abs(out.astype(jnp.float32) - ref.astype(jnp.float32)))))


if __name__ == "__main__":
    key = jax.random.PRNGKey(0)
    k0, k1, k2 = jax.random.split(key, 3)

    # main case (module-scale shapes)
    _check(jax.random.normal(k0, (2, 4, 16, 16), jnp.float32), padding=2)

    # bf16 (sublane packing) case
    _check(jax.random.normal(k1, (2, 4, 16, 16), jnp.float32).astype(jnp.bfloat16),
           padding=2)

    # non-multiple-of-128 width / odd pad (masked-store path)
    _check(jax.random.normal(k2, (1, 3, 24, 48), jnp.float32), padding=3)

    print("KERNEL_OK")
</pallas_src>

<mosaic_0001>
module attributes {stable_mosaic.version = 11 : i64} {
  func.func @spherical_pad_kernel(%arg0: i32, %arg1: i32, %arg2: memref<1x4x16x16xf32, #tpu.memory_space<vmem>>, %arg3: memref<1x4x20x20xf32, #tpu.memory_space<vmem>>) attributes {dimension_semantics = [#tpu.dimension_semantics<parallel>, #tpu.dimension_semantics<parallel>], iteration_bounds = array<i64: 2, 1>, scalar_prefetch = 0 : i64, scratch_operands = 0 : i64, tpu.core_type = #tpu.core_type<tc>, window_params = [{transform_indices = @transform_0, window_bounds = array<i64: 1, 4, 16, 16>}, {transform_indices = @transform_1, window_bounds = array<i64: 1, 4, 20, 20>}]} {
    %c0 = arith.constant 0 : index
    %c0_0 = arith.constant 0 : index
    %c0_1 = arith.constant 0 : index
    %c0_2 = arith.constant 0 : index
    %0 = vector.load %arg2[%c0, %c0_0, %c0_1, %c0_2] : memref<1x4x16x16xf32, #tpu.memory_space<vmem>>, vector<1x4x16x16xf32>
    %1 = vector.shape_cast %0 : vector<1x4x16x16xf32> to vector<4x16x16xf32>
    %2 = vector.extract_strided_slice %1 {offsets = [0, 0, 14], sizes = [4, 16, 2], strides = [1, 1, 1]} : vector<4x16x16xf32> to vector<4x16x2xf32>
    %3 = vector.extract_strided_slice %1 {offsets = [0, 0, 0], sizes = [4, 16, 2], strides = [1, 1, 1]} : vector<4x16x16xf32> to vector<4x16x2xf32>
    %4 = tpu.concatenate %2, %1, %3 in 2 : vector<4x16x2xf32>, vector<4x16x16xf32>, vector<4x16x2xf32> -> vector<4x16x20xf32>
    %5 = vector.extract_strided_slice %4 {offsets = [0, 0, 0], sizes = [4, 1, 20], strides = [1, 1, 1]} : vector<4x16x20xf32> to vector<4x1x20xf32>
    %6 = vector.shape_cast %5 : vector<4x1x20xf32> to vector<4x1x20xf32>
    %7 = vector.broadcast %6 : vector<4x1x20xf32> to vector<4x2x20xf32>
    %8 = vector.extract_strided_slice %4 {offsets = [0, 15, 0], sizes = [4, 1, 20], strides = [1, 1, 1]} : vector<4x16x20xf32> to vector<4x1x20xf32>
    %9 = vector.shape_cast %8 : vector<4x1x20xf32> to vector<4x1x20xf32>
    %10 = vector.broadcast %9 : vector<4x1x20xf32> to vector<4x2x20xf32>
    %11 = tpu.concatenate %7, %4, %10 in 1 : vector<4x2x20xf32>, vector<4x16x20xf32>, vector<4x2x20xf32> -> vector<4x20x20xf32>
    %c0_3 = arith.constant 0 : index
    %c0_4 = arith.constant 0 : index
    %c0_5 = arith.constant 0 : index
    %c0_6 = arith.constant 0 : index
    %12 = vector.load %arg3[%c0_3, %c0_4, %c0_5, %c0_6] : memref<1x4x20x20xf32, #tpu.memory_space<vmem>>, vector<1x4x20x20xf32>
    %13 = vector.shape_cast %12 : vector<1x4x20x20xf32> to vector<4x20x20xf32>
    %14 = vector.shape_cast %11 : vector<4x20x20xf32> to vector<1x4x20x20xf32>
    tpu.vector_store %arg3[%c0_3, %c0_4, %c0_5, %c0_6], %14 {strides = array<i32>} : memref<1x4x20x20xf32, #tpu.memory_space<vmem>>, vector<1x4x20x20xf32>,
    return
  }
  func.func @transform_0(%arg0: i32, %arg1: i32) -> (i32, i32, i32, i32) {
    %c0_i32 = arith.constant 0 : i32
    %c0_i32_0 = arith.constant 0 : i32
    %c0_i32_1 = arith.constant 0 : i32
    return %arg0, %arg1, %c0_i32, %c0_i32_0 : i32, i32, i32, i32
  }
  func.func @transform_1(%arg0: i32, %arg1: i32) -> (i32, i32, i32, i32) {
    %c0_i32 = arith.constant 0 : i32
    %c0_i32_0 = arith.constant 0 : i32
    %c0_i32_1 = arith.constant 0 : i32
    return %arg0, %arg1, %c0_i32, %c0_i32_0 : i32, i32, i32, i32
  }
}

</mosaic_0001>

<llo_original>
// kernel: tpu_custom_call.1
$region0: #{tpu_custom_call.1}
  #allocation0 [shape = 'u32[]', space=smem, size = 0x4, offset = 0x4, fixed_abs, tag = 'smem constant byte address 0x4 - core index']
  #allocation1 [shape = 'u32[144,128]{1,0:T(1,128)}', space=vmem, size = 0x12000, scoped, tag = 'internal scratch']
  %s0 = inlined_call_operand.hbm [shape: f32[2,4,16,16], index: 0, kind: input, shape index: {}]
  %s1 = inlined_call_operand.vmem [shape: f32[2,4,20,20], index: 1, kind: output, shape index: {}]
  %s2 = sld [smem:[#allocation0]]
  $region41: #{tpu_custom_call.1} parent=0
    _
  %s4 = ssub.s32 1, %s2
  %s5 = scalar_select 0, %s4, %s2
  $region1: #{tpu_custom_call.1} parent=0
    #allocation2 [shape = 'u8[65536]{0}', space=vmem, size = 0x10000, scoped, tag = 'input window, operand 0']
    #allocation3 [shape = 's32[2]{0}', space=sflag, size = 0x8, scoped, tag = 'scoped memory for tpu_custom_call.1']
    %6 = vsyncpa [#allocation3], 0
    %s7 = scalar_lea.sflag [#allocation3], 1
    %8 = vsyncpa %s7, 0
    loop: start=0, step=1, limit=4
    $region2: #{tpu_custom_call.1} parent=1 // loop_pre_header
      _
    $region3: #{tpu_custom_call.1} parent=1 // loop_header
      %s10 = sphi 0, %s14
      %p11 = scmp.ge.s32.totalorder %s10, 4
      %s17 = sphi 0, %s29
      %s18 = sphi 0, %s25
      %s19 = sphi 0, %s17
      %s20 = sphi 0, %s18
      %s21 = sphi 0, %s19
      %s22 = sphi 0, %s20
      %s34 = sphi 0, %s36
      %s37 = sphi 0, %s34
      %s38 = sphi 0, %s37
      %s54 = sphi 0, %s38
      %s62 = sphi 0, %s64
      %s65 = sphi 0, %s62
      %s66 = sphi 0, %s65
      %s82 = sphi 0, %s66
    $region4: #{tpu_custom_call.1} parent=1 // loop_header_branch
      %13 = sbr.rel (%p11) target = $region8
    $region5: #{tpu_custom_call.1} parent=1 // loop_body
      %s15 = ssub.s32 %s10, 1
      %s16 = ssub.s32 %s10, 2
      %s23 = sadd.s32 1, %s18
      %p24 = scmp.ge.s32.totalorder %s23, 1
      %s25 = scalar_select %p24, 0, %s23
      %s26 = sadd.s32 1, %s17
      %s27 = scalar_select %p24, %s26, %s17
      %p28 = scmp.ge.s32.totalorder %s27, 2
      %s29 = scalar_select %p28, 0, %s27
      %s30 = ssub.s32 %s17, %s29
      %s31 = ssub.s32 %s18, %s25
      %s32 = sor.u32 %s30, %s31
      %p33 = scmp.eq.s32.totalorder %s32, 0
      %s35 = sadd.s32 %s34, 1
      %s36 = scalar_select %p33, %s34, %s35
      %p39 = pneg %p33
      %p40 = scmp.eq.s32.totalorder %s10, 1
      %p41 = por %p39, %p40
      %p42 = scmp.ne.s32.totalorder %s34, %s37
      %p43 = scmp.eq.s32.totalorder %s10, 0
      %p44 = por %p42, %p43
      %p45 = scmp.ne.s32.totalorder %s34, %s37
      %p46 = scmp.eq.s32.totalorder %s15, 1
      %p47 = por %p45, %p46
      %p48 = scmp.ne.s32.totalorder %s37, %s38
      %p49 = scmp.eq.s32.totalorder %s15, 0
      %p50 = por %p48, %p49
      %p51 = scmp.ne.s32.totalorder %s37, %s38
      %p52 = scmp.eq.s32.totalorder %s16, 1
      %p53 = por %p51, %p52
      %p55 = scmp.ne.s32.totalorder %s38, %s54
      %p56 = scmp.eq.s32.totalorder %s16, 0
      %p57 = por %p55, %p56
      %s58 = ssub.s32 %s17, %s29
      %s59 = ssub.s32 %s18, %s25
      %s60 = sor.u32 %s58, %s59
      %p61 = scmp.eq.s32.totalorder %s60, 0
      %s63 = sadd.s32 %s62, 1
      %s64 = scalar_select %p61, %s62, %s63
      %p67 = pneg %p61
      %p68 = scmp.eq.s32.totalorder %s10, 1
      %p69 = por %p67, %p68
      %p70 = scmp.ne.s32.totalorder %s62, %s65
      %p71 = scmp.eq.s32.totalorder %s10, 0
      %p72 = por %p70, %p71
      %p73 = scmp.ne.s32.totalorder %s62, %s65
      %p74 = scmp.eq.s32.totalorder %s15, 1
      %p75 = por %p73, %p74
      %p76 = scmp.ne.s32.totalorder %s65, %s66
      %p77 = scmp.eq.s32.totalorder %s15, 0
      %p78 = por %p76, %p77
      %p79 = scmp.ne.s32.totalorder %s65, %s66
      %p80 = scmp.eq.s32.totalorder %s16, 1
      %p81 = por %p79, %p80
      %p83 = scmp.ne.s32.totalorder %s66, %s82
      %p84 = scmp.eq.s32.totalorder %s16, 0
      %p85 = por %p83, %p84
      %p86 = scmp.le.s32.totalorder 1, %s10
      %p87 = scmp.lt.s32.totalorder %s10, 3
      %p88 = pnand %p86, %p87
      %p89 = pneg %p88
      // Predicated region
      $region9: #{tpu_custom_call.1} parent=5 // pred_check
        _
      $region10: #{tpu_custom_call.1} parent=5 // pred_check_branch
        %91 = sbr.rel (%p88) target = $region12
      $region11: #{tpu_custom_call.1} parent=5 // pred_region
        %s92 = ssub.s32 %s10, 1
      $region12: #{tpu_custom_call.1} parent=5 // pred_fallthru
        _
      %p93 = scmp.lt.s32.totalorder %s10, 2
      // Predicated region
      $region13: #{tpu_custom_call.1} parent=5 // pred_check
        %p94 = pneg %p93
      $region14: #{tpu_custom_call.1} parent=5 // pred_check_branch
        %96 = sbr.rel (%p94) target = $region16
      $region15: #{tpu_custom_call.1} parent=5 // pred_region
        // Predicated region
        $region17: #{tpu_custom_call.1} parent=15 // pred_check
          %p97 = pneg %p44
        $region18: #{tpu_custom_call.1} parent=15 // pred_check_branch
          %99 = sbr.rel (%p97) target = $region20
        $region19: #{tpu_custom_call.1} parent=15 // pred_region
          %s100 = sand.u32 %s34, 1
          %s101 = scalar_lea.sflag [#allocation3], %s100
          %s102 = sand.u32 %s34, 1
          %s103 = smul.addr %s102, 64
          %s104 = scalar_lea.vmem [#allocation2], %s103
          %s105 = smul.u32 4, %s18
          %s107 = ssub.s32 1024, 1024
          %108 = vsyncadd %s101, %s107
          %s109 = smul.addr %s105, 2
          %s110 = smul.addr %s17, 8
          %s111 = sadd.s32 %s109, %s110
          %s112 = smul.addr %s111, 128
          %s113 = scalar_lea.hbm %s0, %s112
          %s114 = sshll.u32 %s104, 4
          %s115 = int_to_ptr.vmem [resolvable:$true] %s114
          %120 = dma.hbm_to_vmem [thread:$0]  %s113, 1024, %s115, %s101, 128, 128, 8
        $region20: #{tpu_custom_call.1} parent=15 // pred_fallthru
          _
      $region16: #{tpu_custom_call.1} parent=5 // pred_fallthru
        _
      %p121 = scmp.le.s32.totalorder 1, %s10
      %p122 = scmp.lt.s32.totalorder %s10, 3
      %p123 = pnand %p121, %p122
      %p124 = pneg %p123
      // Predicated region
      $region21: #{tpu_custom_call.1} parent=5 // pred_check
        _
      $region22: #{tpu_custom_call.1} parent=5 // pred_check_branch
        %126 = sbr.rel (%p123) target = $region24
      $region23: #{tpu_custom_call.1} parent=5 // pred_region
        %s127 = ssub.s32 %s10, 1
        %s128 = sand.u32 %s37, 1
        %s129 = scalar_lea.sflag [#allocation3], %s128
        %s130 = sand.u32 %s37, 1
        %s131 = smul.addr %s130, 64
        %s132 = scalar_lea.vmem [#allocation2], %s131
        // Predicated region
        $region25: #{tpu_custom_call.1} parent=23 // pred_check
          %p133 = pneg %p50
        $region26: #{tpu_custom_call.1} parent=23 // pred_check_branch
          %135 = sbr.rel (%p133) target = $region28
        $region27: #{tpu_custom_call.1} parent=23 // pred_region
          %136 = dma.done %s129, 1024
        $region28: #{tpu_custom_call.1} parent=23 // pred_fallthru
          _
        %s137 = sand.u32 %s37, 1
        %s138 = scalar_lea.sflag [#allocation3], %s137
        %s139 = sand.u32 %s37, 1
        %s140 = smul.addr %s139, 64
        %s141 = scalar_lea.vmem [#allocation2], %s140
        %p142 = pneg %p50
        %p143 = pneg %p47
        %p144 = pneg %p78
        %p145 = pneg %p75
        %s146 = smul.u32 4, %s20
        %p147 = scmp.lt.s32.totalorder %s19, 1
        %s148 = scalar_select %p147, %s19, 1
        %p149 = scmp.lt.s32.totalorder %s146, 3
        %s150 = scalar_select %p149, %s146, 3
        %s151 = smul.addr %s150, 3
        %s152 = smul.addr %s148, 12
        %s153 = sadd.s32 %s151, %s152
        %s154 = smul.addr %s153, 8
        %s155 = scalar_lea.vmem %s1, %s154
        %s156 = smul.u32 4, %s20
        %s157 = smul.u32 4, %s20
        %p158 = scmp.lt.s32.totalorder %s19, 1
        %s159 = scalar_select %p158, %s19, 1
        %p160 = scmp.lt.s32.totalorder %s157, 3
        %s161 = scalar_select %p160, %s157, 3
        %s162 = smul.addr %s161, 3
        %s163 = smul.addr %s159, 12
        %s164 = sadd.s32 %s162, %s163
        %s165 = smul.addr %s164, 8
        %s166 = scalar_lea.vmem %s1, %s165
        %s167 = smul.u32 4, %s20
        %v168 = vld [vmem:[%s132] sm:$0xff]
        %v169 = vld [vmem:[%s132 + $0x8] sm:$0xff]
        %v170 = vld [vmem:[%s132 + $0x10] sm:$0xff]
        %v171 = vld [vmem:[%s132 + $0x18] sm:$0xff]
        %v172 = vld [vmem:[%s132 + $0x20] sm:$0xff]
        %v173 = vld [vmem:[%s132 + $0x28] sm:$0xff]
        %v174 = vld [vmem:[%s132 + $0x30] sm:$0xff]
        %v175 = vld [vmem:[%s132 + $0x38] sm:$0xff]
        %184 = vrot.lane.b32.xlu0 %v168, 114
        %v185 = vpop.permute.xlu0 %184
        %186 = vrot.lane.b32.xlu0 %v169, 114
        %v187 = vpop.permute.xlu0 %186
        %188 = vrot.lane.b32.xlu0 %v170, 114
        %v189 = vpop.permute.xlu0 %188
        %190 = vrot.lane.b32.xlu0 %v171, 114
        %v191 = vpop.permute.xlu0 %190
        %192 = vrot.lane.b32.xlu0 %v172, 114
        %v193 = vpop.permute.xlu0 %192
        %194 = vrot.lane.b32.xlu0 %v173, 114
        %v195 = vpop.permute.xlu0 %194
        %196 = vrot.lane.b32.xlu0 %v174, 114
        %v197 = vpop.permute.xlu0 %196
        %198 = vrot.lane.b32.xlu0 %v175, 114
        %v199 = vpop.permute.xlu0 %198
        %208 = vrot.lane.b32.xlu0 %v168, 2
        %v209 = vpop.permute.xlu0 %208
        %210 = vrot.lane.b32.xlu0 %v169, 2
        %v211 = vpop.permute.xlu0 %210
        %212 = vrot.lane.b32.xlu0 %v170, 2
        %v213 = vpop.permute.xlu0 %212
        %214 = vrot.lane.b32.xlu0 %v171, 2
        %v215 = vpop.permute.xlu0 %214
        %216 = vrot.lane.b32.xlu0 %v172, 2
        %v217 = vpop.permute.xlu0 %216
        %218 = vrot.lane.b32.xlu0 %v173, 2
        %v219 = vpop.permute.xlu0 %218
        %220 = vrot.lane.b32.xlu0 %v174, 2
        %v221 = vpop.permute.xlu0 %220
        %222 = vrot.lane.b32.xlu0 %v175, 2
        %v223 = vpop.permute.xlu0 %222
        %232 = vrot.lane.b32.xlu0 %v168, 18
        %v233 = vpop.permute.xlu0 %232
        %234 = vrot.lane.b32.xlu0 %v169, 18
        %v235 = vpop.permute.xlu0 %234
        %236 = vrot.lane.b32.xlu0 %v170, 18
        %v237 = vpop.permute.xlu0 %236
        %238 = vrot.lane.b32.xlu0 %v171, 18
        %v239 = vpop.permute.xlu0 %238
        %240 = vrot.lane.b32.xlu0 %v172, 18
        %v241 = vpop.permute.xlu0 %240
        %242 = vrot.lane.b32.xlu0 %v173, 18
        %v243 = vpop.permute.xlu0 %242
        %244 = vrot.lane.b32.xlu0 %v174, 18
        %v245 = vpop.permute.xlu0 %244
        %246 = vrot.lane.b32.xlu0 %v175, 18
        %v247 = vpop.permute.xlu0 %246
        %vm256 = vcmask 15360
        %v257 = vsel %vm256, %v185, %v209
        %v258 = vsel %vm256, %v187, %v211
        %v259 = vsel %vm256, %v189, %v213
        %v260 = vsel %vm256, %v191, %v215
        %v261 = vsel %vm256, %v193, %v217
        %v262 = vsel %vm256, %v195, %v219
        %v263 = vsel %vm256, %v197, %v221
        %v264 = vsel %vm256, %v199, %v223
        %vm265 = vcmask 146432
        %v266 = vsel %vm265, %v257, %v233
        %v267 = vsel %vm265, %v258, %v235
        %v268 = vsel %vm265, %v259, %v237
        %v269 = vsel %vm265, %v260, %v239
        %v270 = vsel %vm265, %v261, %v241
        %v271 = vsel %vm265, %v262, %v243
        %v272 = vsel %vm265, %v263, %v245
        %v273 = vsel %vm265, %v264, %v247
        %v274 = vlaneseq
        %v275 = vshrl.u32 %v274, 7
        %v276 = vsub.s32 0, %v275
        %v277 = vrot.slane %v266, %v276
        %v278 = vlaneseq
        %v279 = vshrl.u32 %v278, 7
        %v280 = vsub.s32 0, %v279
        %v281 = vrot.slane %v268, %v280
        %v282 = vlaneseq
        %v283 = vshrl.u32 %v282, 7
        %v284 = vsub.s32 0, %v283
        %v285 = vrot.slane %v270, %v284
        %v286 = vlaneseq
        %v287 = vshrl.u32 %v286, 7
        %v288 = vsub.s32 0, %v287
        %v289 = vrot.slane %v272, %v288
        %v290 = vlaneseq
        %v291 = vshrl.u32 %v290, 7
        %v292 = vsub.s32 7, %v291
        %v293 = vrot.slane %v267, %v292
        %v294 = vlaneseq
        %v295 = vshrl.u32 %v294, 7
        %v296 = vsub.s32 7, %v295
        %v297 = vrot.slane %v269, %v296
        %v298 = vlaneseq
        %v299 = vshrl.u32 %v298, 7
        %v300 = vsub.s32 7, %v299
        %v301 = vrot.slane %v271, %v300
        %v302 = vlaneseq
        %v303 = vshrl.u32 %v302, 7
        %v304 = vsub.s32 7, %v303
        %v305 = vrot.slane %v273, %v304
        %vm314 = vcmask 1041408
        %v315 = vrot.slane %v266, 6
        %v316 = vrot.slane %v267, 6
        %v317 = vsel %vm314, %v315, %v316
        %v318 = vrot.slane %v268, 6
        %v319 = vrot.slane %v269, 6
        %v320 = vsel %vm314, %v318, %v319
        %v321 = vrot.slane %v270, 6
        %v322 = vrot.slane %v271, 6
        %v323 = vsel %vm314, %v321, %v322
        %v324 = vrot.slane %v272, 6
        %v325 = vrot.slane %v273, 6
        %v326 = vsel %vm314, %v324, %v325
        %v339 = vsel %vm314, %v277, %v315
        %v340 = vsel %vm314, %v281, %v318
        %v341 = vsel %vm314, %v285, %v321
        %v342 = vsel %vm314, %v289, %v324
        %v343 = vsel %vm314, %v316, %v293
        %v344 = vsel %vm314, %v319, %v297
        %v345 = vsel %vm314, %v322, %v301
        %v346 = vsel %vm314, %v325, %v305
        %vm347 = vcmask 162816
        %348 = vst.msk [vmem:[%s166] sm:$0xff] %vm347, %v339
        %349 = vst.msk [vmem:[%s166 + $0x8] sm:$0xff] %vm347, %v317
        %vm350 = vcmask 158720
        %351 = vst.msk [vmem:[%s166 + $0x10] sm:$0xf] %vm350, %v343
        %352 = vst.msk [vmem:[%s166 + $0x18] sm:$0xff] %vm347, %v340
        %353 = vst.msk [vmem:[%s166 + $0x20] sm:$0xff] %vm347, %v320
        %354 = vst.msk [vmem:[%s166 + $0x28] sm:$0xf] %vm350, %v344
        %355 = vst.msk [vmem:[%s166 + $0x30] sm:$0xff] %vm347, %v341
        %356 = vst.msk [vmem:[%s166 + $0x38] sm:$0xff] %vm347, %v323
        %357 = vst.msk [vmem:[%s166 + $0x40] sm:$0xf] %vm350, %v345
        %358 = vst.msk [vmem:[%s166 + $0x48] sm:$0xff] %vm347, %v342
        %359 = vst.msk [vmem:[%s166 + $0x50] sm:$0xff] %vm347, %v326
        %360 = vst.msk [vmem:[%s166 + $0x58] sm:$0xf] %vm350, %v346
        %s361 = smul.u32 4, %s20
        %p362 = scmp.lt.s32.totalorder %s19, 1
        %s363 = scalar_select %p362, %s19, 1
        %p364 = scmp.lt.s32.totalorder %s361, 3
        %s365 = scalar_select %p364, %s361, 3
        %s366 = smul.addr %s365, 3
        %s367 = smul.addr %s363, 12
        %s368 = sadd.s32 %s366, %s367
        %s369 = smul.addr %s368, 8
        %s370 = scalar_lea.vmem %s1, %s369
        // Predicated region
        $region29: #{tpu_custom_call.1} parent=23 // pred_check
          %p371 = pneg %p75
        $region30: #{tpu_custom_call.1} parent=23 // pred_check_branch
          %373 = sbr.rel (%p371) target = $region32
        $region31: #{tpu_custom_call.1} parent=23 // pred_region
          %s374 = smul.u32 4, %s20
        $region32: #{tpu_custom_call.1} parent=23 // pred_fallthru
          _
      $region24: #{tpu_custom_call.1} parent=5 // pred_fallthru
        _
      %p375 = scmp.le.s32.totalorder 2, %s10
      // Predicated region
      $region33: #{tpu_custom_call.1} parent=5 // pred_check
        %p376 = pneg %p375
      $region34: #{tpu_custom_call.1} parent=5 // pred_check_branch
        %378 = sbr.rel (%p376) target = $region36
      $region35: #{tpu_custom_call.1} parent=5 // pred_region
        %s379 = ssub.s32 %s10, 2
        // Predicated region
        $region37: #{tpu_custom_call.1} parent=35 // pred_check
          %p380 = pneg %p81
        $region38: #{tpu_custom_call.1} parent=35 // pred_check_branch
          %382 = sbr.rel (%p380) target = $region40
        $region39: #{tpu_custom_call.1} parent=35 // pred_region
          %s383 = smul.u32 4, %s22
          %p384 = scmp.lt.s32.totalorder %s21, 1
          %s385 = scalar_select %p384, %s21, 1
          %p386 = scmp.lt.s32.totalorder %s383, 3
          %s387 = scalar_select %p386, %s383, 3
          %s388 = smul.addr %s387, 3
          %s389 = smul.addr %s385, 12
          %s390 = sadd.s32 %s388, %s389
          %s391 = smul.addr %s390, 8
          %s392 = scalar_lea.vmem %s1, %s391
        $region40: #{tpu_custom_call.1} parent=35 // pred_fallthru
          _
      $region36: #{tpu_custom_call.1} parent=5 // pred_fallthru
        _
    $region6: #{tpu_custom_call.1} parent=1 // loop_footer
      %s14 = sadd.s32 1, %s10
    $region7: #{tpu_custom_call.1} parent=1 // loop_footer_branch
      %9 = sbr.rel target = $region3
    $region8: #{tpu_custom_call.1} parent=1 // loop_exit
      _
    %393 = vsyncpa [#allocation3], 1
    %s394 = scalar_lea.sflag [#allocation3], 1
    %395 = vsyncpa %s394, 1

</llo_original>
